<compile_context>
chip_gen: v7x
topology: tpu7x:2x2x1
jax: 0.10.0
libtpu: 0.0.40
codegen_flags: <defaults>
</compile_context>

<pallas_src>
import functools

import jax
import jax.numpy as jnp
from jax import lax
from jax.experimental import pallas as pl
from jax.experimental.pallas import tpu as pltpu

_MIB = 1024 * 1024


def _round_up(a, m):
    return ((a + m - 1) // m) * m


def _vmem_capacity_bytes():
    """Physical per-TensorCore VMEM; falls back to the tightest budget (v7x)."""
    try:
        cap = int(getattr(pltpu.get_tpu_info(), "vmem_capacity_bytes", 0))
        if cap > 0:
            return cap
    except Exception:
        pass
    return 64 * _MIB


def _pick_block_j(dim, target):
    """Largest multiple of 128 that divides `dim` and is <= target (else dim)."""
    if dim <= target:
        return dim
    bj = max(128, (target // 128) * 128)
    while bj >= 128:
        if dim % bj == 0:
            return bj
        bj -= 128
    return dim


def _gelu(h, approximate):
    if approximate:
        # tanh formulation -> transcendental goes to the EUP slot (VALU relief).
        c0 = jnp.float32(0.7978845608028654)   # sqrt(2/pi)
        c1 = jnp.float32(0.044715)
        return jnp.float32(0.5) * h * (jnp.float32(1.0)
                                       + jnp.tanh(c0 * (h + c1 * h * h * h)))
    # exact erf formulation == torch.nn.GELU() default
    inv_sqrt2 = jnp.float32(0.7071067811865476)
    return jnp.float32(0.5) * h * (jnp.float32(1.0) + lax.erf(h * inv_sqrt2))


# --------------------------------------------------------------------------- #
# Kernels
# --------------------------------------------------------------------------- #
def _embedfc_resident_kernel(x_ref, w1_ref, b1_ref, w2_ref, b2_ref, o_ref, *,
                             compute_dtype, approximate_gelu):
    # Cast in VMEM (mirrors torch's x.type(torch.float32)); no HBM f32 copy of x.
    x = x_ref[...].astype(compute_dtype)
    h = jnp.dot(x, w1_ref[...], preferred_element_type=jnp.float32) + b1_ref[...]
    h = _gelu(h, approximate_gelu).astype(compute_dtype)
    o_ref[...] = (jnp.dot(h, w2_ref[...], preferred_element_type=jnp.float32)
                  + b2_ref[...]).astype(o_ref.dtype)


def _embedfc_tiled_kernel(x_ref, w1_ref, b1_ref, w2_ref, b2_ref, o_ref, acc_ref, *,
                          compute_dtype, approximate_gelu):
    # Grid = (row tiles, emb_dim tiles). The j axis tiles w1 columns / w2 rows
    # and is a reduction into an f32 accumulator (output block constant in j).
    j = pl.program_id(1)

    @pl.when(j == 0)
    def _():
        acc_ref[...] = jnp.zeros_like(acc_ref)

    x = x_ref[...].astype(compute_dtype)
    h = jnp.dot(x, w1_ref[...], preferred_element_type=jnp.float32) + b1_ref[...]
    h = _gelu(h, approximate_gelu).astype(compute_dtype)
    acc_ref[...] += jnp.dot(h, w2_ref[...], preferred_element_type=jnp.float32)

    @pl.when(j == pl.num_programs(1) - 1)
    def _():
        o_ref[...] = (acc_ref[...] + b2_ref[...]).astype(o_ref.dtype)


# --------------------------------------------------------------------------- #
# Wrapper
# --------------------------------------------------------------------------- #
@functools.partial(
    jax.jit,
    static_argnames=("input_dim", "block_n", "block_j", "compute_dtype",
                     "approximate_gelu", "force_tiled"))
def embed_fc_forward(x, w1, b1, w2, b2, *, input_dim, block_n=None, block_j=None,
                     compute_dtype=jnp.float32, approximate_gelu=False,
                     force_tiled=False):
    compute_dtype = jnp.dtype(compute_dtype)
    x2d = x.reshape(-1, input_dim)            # keep original dtype; cast in-kernel
    n = x2d.shape[0]
    emb_dim = w1.shape[1]

    # MXU operands in compute_dtype (bf16 path halves weight DMA + VMEM);
    # biases and accumulation stay f32.  (Ideally weights are stored in bf16
    # already so this cast is a no-op.)
    w1c = w1 if w1.dtype == compute_dtype else w1.astype(compute_dtype)
    w2c = w2 if w2.dtype == compute_dtype else w2.astype(compute_dtype)
    b1c = b1.astype(jnp.float32).reshape(1, emb_dim)
    b2c = b2.astype(jnp.float32).reshape(1, emb_dim)

    x_isize = jnp.dtype(x2d.dtype).itemsize
    w_isize = compute_dtype.itemsize

    # Per-generation VMEM ceiling: ~80% of physical per-TC VMEM keeps headroom
    # for compiler-internal scratch (v7x 64MiB -> ~51MiB; v5e/v6e -> ~102MiB).
    ceiling = (_vmem_capacity_bytes() * 4) // 5

    # ---- row tile -----------------------------------------------------------
    bn = 1024 if block_n is None else block_n
    if n > 256:
        # keep >= 2 row tiles so "parallel" can shard across v7x's 2 TensorCores
        bn = min(bn, _round_up(pl.cdiv(n, 2), 8))
    bn = n if bn >= n else max(8, (bn // 8) * 8)

    def _row_tiles(bn_):
        return pl.cdiv(n, bn_)

    def _resident_need(bn_):
        xb = 3 if _row_tiles(bn_) >= 3 else 2
        return ((input_dim * emb_dim + emb_dim * emb_dim) * w_isize   # weights, 1x
                + 2 * emb_dim * 4                                     # biases
                + xb * bn_ * input_dim * x_isize                      # x tiles
                + 2 * bn_ * emb_dim * 4)                              # out tiles

    if not force_tiled:
        # Shrink the row tile before giving up on fully-resident weights.
        while bn > 256 and bn < n and _resident_need(bn) * 5 // 4 > ceiling:
            bn = max(256, _round_up(bn // 2, 8))
            if bn >= n:
                bn = n
                break

    use_resident = (not force_tiled) and (_resident_need(bn) * 5 // 4 <= ceiling)
    n_row_tiles = _row_tiles(bn)
    x_bufs = 3 if n_row_tiles >= 3 else 2

    # ---------------------------- resident-weights path ---------------------
    if use_resident:
        need = _resident_need(bn)
        vmem_limit = int(min(ceiling, max(need * 5 // 4, 32 * _MIB)))

        def _resident_spec(shape):
            # constant index_map -> loaded once; single buffer => 1x VMEM
            return pl.BlockSpec(shape, lambda i: (0, 0),
                                pipeline_mode=pl.Buffered(1))

        if x_bufs >= 3:
            x_spec = pl.BlockSpec((bn, input_dim), lambda i: (i, 0),
                                  pipeline_mode=pl.Buffered(x_bufs))
        else:
            x_spec = pl.BlockSpec((bn, input_dim), lambda i: (i, 0))

        kernel = functools.partial(_embedfc_resident_kernel,
                                   compute_dtype=compute_dtype,
                                   approximate_gelu=approximate_gelu)
        return pl.pallas_call(
            kernel,
            out_shape=jax.ShapeDtypeStruct((n, emb_dim), jnp.float32),
            grid_spec=pltpu.PrefetchScalarGridSpec(
                num_scalar_prefetch=0,
                grid=(n_row_tiles,),
                in_specs=[
                    x_spec,
                    _resident_spec((input_dim, emb_dim)),   # w1
                    _resident_spec((1, emb_dim)),           # b1
                    _resident_spec((emb_dim, emb_dim)),     # w2
                    _resident_spec((1, emb_dim)),           # b2
                ],
                out_specs=pl.BlockSpec((bn, emb_dim), lambda i: (i, 0)),
            ),
            compiler_params=pltpu.CompilerParams(
                dimension_semantics=("parallel",),
                vmem_limit_bytes=vmem_limit,
            ),
        )(x2d, w1c, b1c, w2c, b2c)

    # ---------------------------- tiled-weights fallback --------------------
    bj = _pick_block_j(emb_dim, block_j if block_j is not None else 512)

    def _tiled_need(bn_, bj_):
        xb = 3 if _row_tiles(bn_) >= 3 else 2
        return (xb * bn_ * input_dim * x_isize
                + 2 * (input_dim * bj_ + bj_ * emb_dim) * w_isize   # w1/w2 tiles (2x)
                + 2 * bj_ * 4 + 2 * emb_dim * 4                     # b1 tile + b2
                + 2 * bn_ * emb_dim * 4                             # out tiles
                + bn_ * emb_dim * 4)                                # accumulator

    while bn > 256 and bn < n and _tiled_need(bn, bj) * 5 // 4 > ceiling:
        bn = max(256, _round_up(bn // 2, 8))
    while bj > 128 and _tiled_need(bn, bj) * 5 // 4 > ceiling:
        new_bj = _pick_block_j(emb_dim, max(128, bj // 2))
        if new_bj >= bj:
            break
        bj = new_bj

    need = _tiled_need(bn, bj)
    if need * 5 // 4 > ceiling:
        raise ValueError(
            f"EmbedFC tiling does not fit VMEM: need~{need / _MIB:.1f}MiB, "
            f"ceiling~{ceiling / _MIB:.1f}MiB (input_dim={input_dim}, emb_dim={emb_dim})")
    vmem_limit = int(min(ceiling, max(need * 5 // 4, 32 * _MIB)))

    n_row_tiles = _row_tiles(bn)
    n_col_tiles = emb_dim // bj
    x_bufs = 3 if n_row_tiles >= 3 else 2
    if x_bufs >= 3:
        x_spec = pl.BlockSpec((bn, input_dim), lambda i, j: (i, 0),
                              pipeline_mode=pl.Buffered(x_bufs))
    else:
        x_spec = pl.BlockSpec((bn, input_dim), lambda i, j: (i, 0))

    kernel = functools.partial(_embedfc_tiled_kernel,
                               compute_dtype=compute_dtype,
                               approximate_gelu=approximate_gelu)
    return pl.pallas_call(
        kernel,
        out_shape=jax.ShapeDtypeStruct((n, emb_dim), jnp.float32),
        grid_spec=pltpu.PrefetchScalarGridSpec(
            num_scalar_prefetch=0,
            grid=(n_row_tiles, n_col_tiles),
            in_specs=[
                x_spec,
                pl.BlockSpec((input_dim, bj), lambda i, j: (0, j)),   # w1 col tile
                pl.BlockSpec((1, bj),         lambda i, j: (0, j)),   # b1 col tile
                pl.BlockSpec((bj, emb_dim),   lambda i, j: (j, 0)),   # w2 row tile
                pl.BlockSpec((1, emb_dim),    lambda i, j: (0, 0)),   # b2
            ],
            out_specs=pl.BlockSpec((bn, emb_dim), lambda i, j: (i, 0)),
            scratch_shapes=[pltpu.VMEM((bn, emb_dim), jnp.float32)],
        ),
        compiler_params=pltpu.CompilerParams(
            dimension_semantics=("parallel", "arbitrary"),
            vmem_limit_bytes=vmem_limit,
        ),
    )(x2d, w1c, b1c, w2c, b2c)


def init_embed_fc_params(key, input_dim, emb_dim):
    # Deterministic synthetic init (uniform, roughly torch.nn.Linear's scale).
    k1, k2, k3, k4 = jax.random.split(key, 4)
    bound1 = 1.0 / jnp.sqrt(jnp.float32(input_dim))
    bound2 = 1.0 / jnp.sqrt(jnp.float32(emb_dim))
    w1 = jax.random.uniform(k1, (input_dim, emb_dim), jnp.float32, -bound1, bound1)
    b1 = jax.random.uniform(k2, (1, emb_dim), jnp.float32, -bound1, bound1)
    w2 = jax.random.uniform(k3, (emb_dim, emb_dim), jnp.float32, -bound2, bound2)
    b2 = jax.random.uniform(k4, (1, emb_dim), jnp.float32, -bound2, bound2)
    return w1, b1, w2, b2


def _reference(xa, input_dim, w1, b1, w2, b2):
    x2d = xa.reshape(-1, input_dim).astype(jnp.float32)
    h = x2d @ w1 + b1
    h = 0.5 * h * (1.0 + lax.erf(h * jnp.float32(0.7071067811865476)))
    return h @ w2 + b2


if __name__ == "__main__":
    input_dim, emb_dim = 64, 128
    key = jax.random.PRNGKey(0)
    kx, kx2, kp, kp2 = jax.random.split(key, 4)

    w1, b1, w2, b2 = init_embed_fc_params(kp, input_dim, emb_dim)

    # 1) Torch-parity path (f32 MXU operands + exact erf GELU), module shape:
    #    (2, 4, 16, 16) -> x.view(-1, 64) -> 32 rows.
    x = jax.random.normal(kx, (2, 4, 16, 16), dtype=jnp.float32)
    out = jax.block_until_ready(
        embed_fc_forward(x, w1, b1, w2, b2, input_dim=input_dim))
    ref = _reference(x, input_dim, w1, b1, w2, b2)
    assert out.shape == (32, emb_dim)
    assert jnp.allclose(out, ref, atol=1e-4, rtol=1e-4)

    # 2) Performance path at a larger, non-multiple N: bf16 MXU operands with
    #    f32 accumulation + tanh GELU; exercises the multi-step row grid,
    #    Buffered(3) x pipeline and the partial last row tile.
    x_big = jax.random.normal(kx2, (4000, input_dim), dtype=jnp.float32)
    out_b = jax.block_until_ready(
        embed_fc_forward(x_big, w1, b1, w2, b2, input_dim=input_dim,
                         compute_dtype=jnp.bfloat16, approximate_gelu=True))
    ref_b = _reference(x_big, input_dim, w1, b1, w2, b2)
    assert out_b.shape == (4000, emb_dim)
    assert jnp.allclose(out_b, ref_b, atol=5e-2, rtol=5e-2)

    # 3) Tiled-weights fallback (forced at small sizes so the path is tested):
    #    emb_dim=256 split into two 128-wide column tiles -> 2-step reduction.
    w1b, b1b, w2b, b2b = init_embed_fc_params(kp2, input_dim, 256)
    out_t = jax.block_until_ready(
        embed_fc_forward(x_big, w1b, b1b, w2b, b2b, input_dim=input_dim,
                         force_tiled=True, block_j=128))
    ref_t = _reference(x_big, input_dim, w1b, b1b, w2b, b2b)
    assert out_t.shape == (4000, 256)
    assert jnp.allclose(out_t, ref_t, atol=1e-4, rtol=1e-4)

    print("KERNEL_OK")
</pallas_src>

<mosaic_0001>
module attributes {stable_mosaic.version = 11 : i64} {
  func.func @_embedfc_resident_kernel(%arg0: i32, %arg1: memref<32x64xf32, #tpu.memory_space<vmem>>, %arg2: memref<64x128xf32, #tpu.memory_space<vmem>>, %arg3: memref<1x128xf32, #tpu.memory_space<vmem>>, %arg4: memref<128x128xf32, #tpu.memory_space<vmem>>, %arg5: memref<1x128xf32, #tpu.memory_space<vmem>>, %arg6: memref<32x128xf32, #tpu.memory_space<vmem>>) attributes {dimension_semantics = [#tpu.dimension_semantics<parallel>], iteration_bounds = array<i64: 1>, scalar_prefetch = 0 : i64, scratch_operands = 0 : i64, tpu.core_type = #tpu.core_type<tc>, window_params = [{transform_indices = @transform_0, window_bounds = array<i64: 32, 64>}, {pipeline_mode = #tpu.pipeline_mode<synchronous>, transform_indices = @transform_1, window_bounds = array<i64: 64, 128>}, {pipeline_mode = #tpu.pipeline_mode<synchronous>, transform_indices = @transform_2, window_bounds = array<i64: 1, 128>}, {pipeline_mode = #tpu.pipeline_mode<synchronous>, transform_indices = @transform_3, window_bounds = array<i64: 128, 128>}, {pipeline_mode = #tpu.pipeline_mode<synchronous>, transform_indices = @transform_4, window_bounds = array<i64: 1, 128>}, {transform_indices = @transform_5, window_bounds = array<i64: 32, 128>}]} {
    %c0 = arith.constant 0 : index
    %c0_0 = arith.constant 0 : index
    %0 = vector.load %arg1[%c0, %c0_0] : memref<32x64xf32, #tpu.memory_space<vmem>>, vector<32x64xf32>
    %c0_1 = arith.constant 0 : index
    %c0_2 = arith.constant 0 : index
    %1 = vector.load %arg2[%c0_1, %c0_2] : memref<64x128xf32, #tpu.memory_space<vmem>>, vector<64x128xf32>
    %cst = arith.constant dense<0.000000e+00> : vector<32x128xf32>
    %2 = tpu.matmul %0, %1, %cst {dimension_numbers = #tpu.dot_dimension_numbers<[1], [0], [0], [1], [0, 0, 1, 1], [], []>} : vector<32x64xf32>, vector<64x128xf32>, vector<32x128xf32> -> vector<32x128xf32>
    %c0_3 = arith.constant 0 : index
    %c0_4 = arith.constant 0 : index
    %3 = vector.load %arg3[%c0_3, %c0_4] : memref<1x128xf32, #tpu.memory_space<vmem>>, vector<1x128xf32>
    %4 = vector.broadcast %3 : vector<1x128xf32> to vector<32x128xf32>
    %5 = arith.addf %2, %4 : vector<32x128xf32>
    %cst_5 = arith.constant 5.000000e-01 : f32
    %6 = vector.broadcast %cst_5 : f32 to vector<32x128xf32>
    %7 = arith.mulf %6, %5 : vector<32x128xf32>
    %cst_6 = arith.constant 0.707106769 : f32
    %8 = vector.broadcast %cst_6 : f32 to vector<32x128xf32>
    %9 = arith.mulf %5, %8 : vector<32x128xf32>
    %10 = math.erf %9 : vector<32x128xf32>
    %cst_7 = arith.constant 1.000000e+00 : f32
    %11 = vector.broadcast %cst_7 : f32 to vector<32x128xf32>
    %12 = arith.addf %11, %10 : vector<32x128xf32>
    %13 = arith.mulf %7, %12 : vector<32x128xf32>
    %c0_8 = arith.constant 0 : index
    %c0_9 = arith.constant 0 : index
    %14 = vector.load %arg4[%c0_8, %c0_9] : memref<128x128xf32, #tpu.memory_space<vmem>>, vector<128x128xf32>
    %cst_10 = arith.constant dense<0.000000e+00> : vector<32x128xf32>
    %15 = tpu.matmul %13, %14, %cst_10 {dimension_numbers = #tpu.dot_dimension_numbers<[1], [0], [0], [1], [0, 0, 1, 1], [], []>} : vector<32x128xf32>, vector<128x128xf32>, vector<32x128xf32> -> vector<32x128xf32>
    %c0_11 = arith.constant 0 : index
    %c0_12 = arith.constant 0 : index
    %16 = vector.load %arg5[%c0_11, %c0_12] : memref<1x128xf32, #tpu.memory_space<vmem>>, vector<1x128xf32>
    %17 = vector.broadcast %16 : vector<1x128xf32> to vector<32x128xf32>
    %18 = arith.addf %15, %17 : vector<32x128xf32>
    %c0_13 = arith.constant 0 : index
    %c0_14 = arith.constant 0 : index
    %19 = vector.load %arg6[%c0_13, %c0_14] : memref<32x128xf32, #tpu.memory_space<vmem>>, vector<32x128xf32>
    tpu.vector_store %arg6[%c0_13, %c0_14], %18 {strides = array<i32>} : memref<32x128xf32, #tpu.memory_space<vmem>>, vector<32x128xf32>,
    return
  }
  func.func @transform_0(%arg0: i32) -> (i32, i32) {
    %c0_i32 = arith.constant 0 : i32
    %c0_i32_0 = arith.constant 0 : i32
    return %arg0, %c0_i32 : i32, i32
  }
  func.func @transform_1(%arg0: i32) -> (i32, i32) {
    %c0_i32 = arith.constant 0 : i32
    %c0_i32_0 = arith.constant 0 : i32
    %c0_i32_1 = arith.constant 0 : i32
    return %c0_i32, %c0_i32_0 : i32, i32
  }
  func.func @transform_2(%arg0: i32) -> (i32, i32) {
    %c0_i32 = arith.constant 0 : i32
    %c0_i32_0 = arith.constant 0 : i32
    %c0_i32_1 = arith.constant 0 : i32
    return %c0_i32, %c0_i32_0 : i32, i32
  }
  func.func @transform_3(%arg0: i32) -> (i32, i32) {
    %c0_i32 = arith.constant 0 : i32
    %c0_i32_0 = arith.constant 0 : i32
    %c0_i32_1 = arith.constant 0 : i32
    return %c0_i32, %c0_i32_0 : i32, i32
  }
  func.func @transform_4(%arg0: i32) -> (i32, i32) {
    %c0_i32 = arith.constant 0 : i32
    %c0_i32_0 = arith.constant 0 : i32
    %c0_i32_1 = arith.constant 0 : i32
    return %c0_i32, %c0_i32_0 : i32, i32
  }
  func.func @transform_5(%arg0: i32) -> (i32, i32) {
    %c0_i32 = arith.constant 0 : i32
    %c0_i32_0 = arith.constant 0 : i32
    return %arg0, %c0_i32 : i32, i32
  }
}

</mosaic_0001>

<llo_original>
// kernel: embed_fc_forward.1
$region0: #{embed_fc_forward.1}
  #allocation0 [shape = 'u32[]', space=smem, size = 0x4, offset = 0x4, fixed_abs, tag = 'smem constant byte address 0x4 - core index']
  #allocation1 [shape = 'u32[144,128]{1,0:T(1,128)}', space=vmem, size = 0x12000, scoped, tag = 'internal scratch']
  %s0 = inlined_call_operand.vmem [shape: f32[32,64], index: 0, kind: input, shape index: {}]
  %s1 = inlined_call_operand.hbm [shape: f32[64,128], index: 1, kind: input, shape index: {}]
  %s2 = inlined_call_operand.vmem [shape: f32[1,128], index: 2, kind: input, shape index: {}]
  %s3 = inlined_call_operand.vmem [shape: f32[128,128], index: 3, kind: input, shape index: {}]
  %s4 = inlined_call_operand.vmem [shape: f32[1,128], index: 4, kind: input, shape index: {}]
  %s5 = inlined_call_operand.hbm [shape: f32[32,128], index: 5, kind: output, shape index: {}]
  %s6 = sld [smem:[#allocation0]]
  $region34: #{embed_fc_forward.1} parent=0
    _
  %s8 = ssub.s32 1, %s6
  %s9 = scalar_select 0, %s8, %s6
  $region1: #{embed_fc_forward.1} parent=0
    #allocation2 [shape = 'u8[32768]{0}', space=vmem, size = 0x8000, scoped, tag = 'input window, operand 1, single buffered']
    #allocation3 [shape = 's32[1]{0}', space=sflag, size = 0x4, scoped, tag = 'scoped memory for embed_fc_forward.1']
    #allocation4 [shape = 's32[1]{0}', space=sflag, size = 0x4, scoped, tag = 'scoped memory for embed_fc_forward.1']
    #allocation5 [shape = 'u8[16384]{0}', space=vmem, size = 0x4000, scoped, tag = 'output window, operand 0, single buffered']
    %10 = vsyncpa [#allocation3], 0
    %11 = vsyncpa [#allocation4], 0
    // Predicated region
    $region2: #{embed_fc_forward.1} parent=1 // pred_check
      _
    $region3: #{embed_fc_forward.1} parent=1 // pred_check_branch
      %13 = sbr.rel (0) target = $region5
    $region4: #{embed_fc_forward.1} parent=1 // pred_region
      _
    $region5: #{embed_fc_forward.1} parent=1 // pred_fallthru
      _
    // Predicated region
    $region6: #{embed_fc_forward.1} parent=1 // pred_check
      _
    $region7: #{embed_fc_forward.1} parent=1 // pred_check_branch
      %15 = sbr.rel (0) target = $region9
    $region8: #{embed_fc_forward.1} parent=1 // pred_region
      %s17 = ssub.s32 1024, 1024
      %18 = vsyncadd [#allocation3], %s17
      %s19 = sshll.u32 [#allocation2], 4
      %s20 = int_to_ptr.vmem [resolvable:$true] %s19
      %25 = dma.hbm_to_vmem [thread:$0]  %s1, 1024, %s20, [#allocation3], 128, 128, 8
    $region9: #{embed_fc_forward.1} parent=1 // pred_fallthru
      _
    // Predicated region
    $region10: #{embed_fc_forward.1} parent=1 // pred_check
      _
    $region11: #{embed_fc_forward.1} parent=1 // pred_check_branch
      %27 = sbr.rel (0) target = $region13
    $region12: #{embed_fc_forward.1} parent=1 // pred_region
      _
    $region13: #{embed_fc_forward.1} parent=1 // pred_fallthru
      _
    // Predicated region
    $region14: #{embed_fc_forward.1} parent=1 // pred_check
      _
    $region15: #{embed_fc_forward.1} parent=1 // pred_check_branch
      %29 = sbr.rel (0) target = $region17
    $region16: #{embed_fc_forward.1} parent=1 // pred_region
      _
    $region17: #{embed_fc_forward.1} parent=1 // pred_fallthru
      _
    // Predicated region
    $region18: #{embed_fc_forward.1} parent=1 // pred_check
      _
    $region19: #{embed_fc_forward.1} parent=1 // pred_check_branch
      %31 = sbr.rel (0) target = $region21
    $region20: #{embed_fc_forward.1} parent=1 // pred_region
      _
    $region21: #{embed_fc_forward.1} parent=1 // pred_fallthru
      _
    // Predicated region
    $region22: #{embed_fc_forward.1} parent=1 // pred_check
      _
    $region23: #{embed_fc_forward.1} parent=1 // pred_check_branch
      %33 = sbr.rel (0) target = $region25
    $region24: #{embed_fc_forward.1} parent=1 // pred_region
      %34 = dma.done [#allocation3], 1024
    $region25: #{embed_fc_forward.1} parent=1 // pred_fallthru
      _
    %v35 = vld [vmem:[%s0] sm:$0xff]
    %v36 = vld [vmem:[%s0 + $0x8] sm:$0xff]
    %v37 = vld [vmem:[%s0 + $0x10] sm:$0xff]
    %v38 = vld [vmem:[%s0 + $0x18] sm:$0xff]
    %v39 = vld [vmem:[#allocation2] sm:$0xff]
    %v40 = vld [vmem:[#allocation2 + $0x8] sm:$0xff]
    %v41 = vld [vmem:[#allocation2 + $0x10] sm:$0xff]
    %v42 = vld [vmem:[#allocation2 + $0x18] sm:$0xff]
    %v43 = vld [vmem:[#allocation2 + $0x20] sm:$0xff]
    %v44 = vld [vmem:[#allocation2 + $0x28] sm:$0xff]
    %v45 = vld [vmem:[#allocation2 + $0x30] sm:$0xff]
    %v46 = vld [vmem:[#allocation2 + $0x38] sm:$0xff]
    %v47 = vld [vmem:[%s2] sm:$0x1]
    %v49 = vlaneseq
    %v50 = vshrl.u32 %v49, 7
    %v51 = vsub.s32 0, %v50
    %v52 = vrot.slane %v47, %v51
    %vm54 = vcmask 523264
    %v56 = vsel %vm54, %v35, 0
    %v59 = vsel %vm54, %v36, 0
    %v62 = vsel %vm54, %v37, 0
    %v65 = vsel %vm54, %v38, 0
    %67 = vmatprep.subr.mxu0 0.0
    %68 = vmatpush1.msra.mxu0 %v39
    %69 = vmatprep.subr.mxu0 0.0
    %70 = vmatpush1.msra.mxu0 %v40
    %71 = vmatprep.subr.mxu0 0.0
    %72 = vmatpush1.msra.mxu0 %v41
    %73 = vmatprep.subr.mxu0 0.0
    %74 = vmatpush1.msra.mxu0 %v42
    %75 = vmatprep.subr.mxu0 0.0
    %76 = vmatpush1.msra.mxu0 %v43
    %77 = vmatprep.subr.mxu0 0.0
    %78 = vmatpush1.msra.mxu0 %v44
    %79 = vmatprep.subr.mxu0 0.0
    %80 = vmatpush1.msra.mxu0 %v45
    %81 = vmatprep.subr.mxu0 0.0
    %82 = vmatpush1.msra.mxu0 %v46
    %83 = vmatprep.subr.mxu0 0.0
    %84 = vmatpush1.msra.mxu0 0.0
    %85 = vmatprep.subr.mxu0 0.0
    %86 = vmatpush1.msra.mxu0 0.0
    %87 = vmatprep.subr.mxu0 0.0
    %88 = vmatpush1.msra.mxu0 0.0
    %89 = vmatprep.subr.mxu0 0.0
    %90 = vmatpush1.msra.mxu0 0.0
    %91 = vmatprep.subr.mxu0 0.0
    %92 = vmatpush1.msra.mxu0 0.0
    %93 = vmatprep.subr.mxu0 0.0
    %94 = vmatpush1.msra.mxu0 0.0
    %95 = vmatprep.subr.mxu0 0.0
    %96 = vmatpush1.msra.mxu0 0.0
    %97 = vmatprep.subr.mxu0 0.0
    %98 = vmatpush1.msra.mxu0 0.0
    %99 = vmatprep.subr.mxu0 0.0
    %100 = vmatpush1.msra.mxu0 0.0
    %101 = vmatprep.subr.mxu0 0.0
    %102 = vmatpush1.msra.mxu0 0.0
    %103 = vmatprep.subr.mxu0 0.0
    %104 = vmatpush1.msra.mxu0 0.0
    %105 = vmatprep.subr.mxu0 0.0
    %106 = vmatpush1.msra.mxu0 0.0
    %107 = vmatprep.subr.mxu0 0.0
    %108 = vmatpush1.msra.mxu0 0.0
    %109 = vmatprep.subr.mxu0 0.0
    %110 = vmatpush1.msra.mxu0 0.0
    %111 = vmatprep.subr.mxu0 0.0
    %112 = vmatpush1.msra.mxu0 0.0
    %113 = vmatprep.subr.mxu0 0.0
    %114 = vmatpush1.msra.mxu0 0.0
    %115 = vmatprep.subr.mxu0 0.0
    %116 = vmatpush1.msra.mxu0 0.0
    %117 = vmatprep.subr.mxu0 0.0
    %118 = vmatpush1.msra.mxu0 0.0
    %119 = vmatprep.subr.mxu0 0.0
    %120 = vmatpush1.msra.mxu0 0.0
    %121 = vmatprep.subr.mxu0 0.0
    %122 = vmatpush1.msra.mxu0 0.0
    %123 = vmatprep.subr.mxu0 0.0
    %124 = vmatpush1.msra.mxu0 0.0
    %125 = vmatprep.subr.mxu0 0.0
    %126 = vmatpush1.msra.mxu0 0.0
    %127 = vmatprep.subr.mxu0 0.0
    %128 = vmatpush1.msra.mxu0 0.0
    %129 = vmatprep.subr.mxu0 0.0
    %130 = vmatpush1.msra.mxu0 0.0
    %131 = vmatprep.mubr.f32.mxu0 0.0
    %132 = vmatmul.mubr.f32.gmra.mrb[0].mxu0 %v56
    %v133 = vpop.f32.mrb[0].mxu0
    %v134 = vadd.f32 %v52, %v133
    %v135 = vpop.f32.mrb[0].mxu0
    %136 = vmatprep.mubr.f32.mxu0 0.0
    %137 = vmatmul.mubr.f32.gmra.mrb[0].mxu0 %v59
    %v138 = vpop.f32.mrb[0].mxu0
    %v139 = vadd.f32 %v52, %v138
    %v140 = vpop.f32.mrb[0].mxu0
    %141 = vmatprep.mubr.f32.mxu0 0.0
    %142 = vmatmul.mubr.f32.gmra.mrb[0].mxu0 %v62
    %v143 = vpop.f32.mrb[0].mxu0
    %v144 = vadd.f32 %v52, %v143
    %v145 = vpop.f32.mrb[0].mxu0
    %146 = vmatprep.mubr.f32.mxu0 0.0
    %147 = vmatmul.mubr.f32.gmra.mrb[0].mxu0 %v65
    %v148 = vpop.f32.mrb[0].mxu0
    %v149 = vadd.f32 %v52, %v148
    %v150 = vpop.f32.mrb[0].mxu0
    %151 = vdwg.mxu0
    %v152 = vmul.f32 %v134, 0.5
    %v153 = vmul.f32 %v139, 0.5
    %v154 = vmul.f32 %v144, 0.5
    %v155 = vmul.f32 %v149, 0.5
    %v156 = vmul.f32 %v134, 0.70710677
    %v157 = vmul.f32 %v139, 0.70710677
    %v158 = vmul.f32 %v144, 0.70710677
    %v159 = vmul.f32 %v149, 0.70710677
    %v160 = verf.f32.pop %v156
    %v161 = verf.f32.pop %v157
    %v162 = verf.f32.pop %v158
    %v163 = verf.f32.pop %v159
    %v164 = vadd.f32 %v160, 1.0
    %v165 = vadd.f32 %v161, 1.0
    %v166 = vadd.f32 %v162, 1.0
    %v167 = vadd.f32 %v163, 1.0
    %v168 = vmul.f32 %v152, %v164
    %v169 = vmul.f32 %v153, %v165
    %v170 = vmul.f32 %v154, %v166
    %v171 = vmul.f32 %v155, %v167
    %v172 = vld [vmem:[%s3] sm:$0xff]
    %v173 = vld [vmem:[%s3 + $0x8] sm:$0xff]
    %v174 = vld [vmem:[%s3 + $0x10] sm:$0xff]
    %v175 = vld [vmem:[%s3 + $0x18] sm:$0xff]
    %v176 = vld [vmem:[%s3 + $0x20] sm:$0xff]
    %v177 = vld [vmem:[%s3 + $0x28] sm:$0xff]
    %v178 = vld [vmem:[%s3 + $0x30] sm:$0xff]
    %v179 = vld [vmem:[%s3 + $0x38] sm:$0xff]
    %v180 = vld [vmem:[%s3 + $0x40] sm:$0xff]
    %v181 = vld [vmem:[%s3 + $0x48] sm:$0xff]
    %v182 = vld [vmem:[%s3 + $0x50] sm:$0xff]
    %v183 = vld [vmem:[%s3 + $0x58] sm:$0xff]
    %v184 = vld [vmem:[%s3 + $0x60] sm:$0xff]
    %v185 = vld [vmem:[%s3 + $0x68] sm:$0xff]
    %v186 = vld [vmem:[%s3 + $0x70] sm:$0xff]
    %v187 = vld [vmem:[%s3 + $0x78] sm:$0xff]
    %v188 = vld [vmem:[%s4] sm:$0x1]
    %v190 = vlaneseq
    %v191 = vshrl.u32 %v190, 7
    %v192 = vsub.s32 0, %v191
    %v193 = vrot.slane %v188, %v192
    %195 = vmatprep.subr.mxu0 0.0
    %196 = vmatpush1.msra.mxu0 %v172
    %197 = vmatprep.subr.mxu0 0.0
    %198 = vmatpush1.msra.mxu0 %v173
    %199 = vmatprep.subr.mxu0 0.0
    %200 = vmatpush1.msra.mxu0 %v174
    %201 = vmatprep.subr.mxu0 0.0
    %202 = vmatpush1.msra.mxu0 %v175
    %203 = vmatprep.subr.mxu0 0.0
    %204 = vmatpush1.msra.mxu0 %v176
    %205 = vmatprep.subr.mxu0 0.0
    %206 = vmatpush1.msra.mxu0 %v177
    %207 = vmatprep.subr.mxu0 0.0
    %208 = vmatpush1.msra.mxu0 %v178
    %209 = vmatprep.subr.mxu0 0.0
    %210 = vmatpush1.msra.mxu0 %v179
    %211 = vmatprep.subr.mxu0 0.0
    %212 = vmatpush1.msra.mxu0 %v180
    %213 = vmatprep.subr.mxu0 0.0
    %214 = vmatpush1.msra.mxu0 %v181
    %215 = vmatprep.subr.mxu0 0.0
    %216 = vmatpush1.msra.mxu0 %v182
    %217 = vmatprep.subr.mxu0 0.0
    %218 = vmatpush1.msra.mxu0 %v183
    %219 = vmatprep.subr.mxu0 0.0
    %220 = vmatpush1.msra.mxu0 %v184
    %221 = vmatprep.subr.mxu0 0.0
    %222 = vmatpush1.msra.mxu0 %v185
    %223 = vmatprep.subr.mxu0 0.0
    %224 = vmatpush1.msra.mxu0 %v186
    %225 = vmatprep.subr.mxu0 0.0
    %226 = vmatpush1.msra.mxu0 %v187
    %227 = vmatprep.subr.mxu0 0.0
    %228 = vmatpush1.msra.mxu0 0.0
    %229 = vmatprep.subr.mxu0 0.0
    %230 = vmatpush1.msra.mxu0 0.0
    %231 = vmatprep.subr.mxu0 0.0
    %232 = vmatpush1.msra.mxu0 0.0
    %233 = vmatprep.subr.mxu0 0.0
    %234 = vmatpush1.msra.mxu0 0.0
    %235 = vmatprep.subr.mxu0 0.0
    %236 = vmatpush1.msra.mxu0 0.0
    %237 = vmatprep.subr.mxu0 0.0
    %238 = vmatpush1.msra.mxu0 0.0
    %239 = vmatprep.subr.mxu0 0.0
    %240 = vmatpush1.msra.mxu0 0.0
    %241 = vmatprep.subr.mxu0 0.0
    %242 = vmatpush1.msra.mxu0 0.0
    %243 = vmatprep.subr.mxu0 0.0
    %244 = vmatpush1.msra.mxu0 0.0
    %245 = vmatprep.subr.mxu0 0.0
    %246 = vmatpush1.msra.mxu0 0.0
    %247 = vmatprep.subr.mxu0 0.0
    %248 = vmatpush1.msra.mxu0 0.0
    %249 = vmatprep.subr.mxu0 0.0
    %250 = vmatpush1.msra.mxu0 0.0
    %251 = vmatprep.subr.mxu0 0.0
    %252 = vmatpush1.msra.mxu0 0.0
    %253 = vmatprep.subr.mxu0 0.0
    %254 = vmatpush1.msra.mxu0 0.0
    %255 = vmatprep.subr.mxu0 0.0
    %256 = vmatpush1.msra.mxu0 0.0
    %257 = vmatprep.subr.mxu0 0.0
    %258 = vmatpush1.msra.mxu0 0.0
    %259 = vmatprep.mubr.f32.mxu0 0.0
    %260 = vmatmul.mubr.f32.gmra.mrb[0].mxu0 %v168
    %v261 = vpop.f32.mrb[0].mxu0
    %v262 = vadd.f32 %v193, %v261
    %v263 = vpop.f32.mrb[0].mxu0
    %264 = vmatprep.mubr.f32.mxu0 0.0
    %265 = vmatmul.mubr.f32.gmra.mrb[0].mxu0 %v169
    %v266 = vpop.f32.mrb[0].mxu0
    %v267 = vadd.f32 %v193, %v266
    %v268 = vpop.f32.mrb[0].mxu0
    %269 = vmatprep.mubr.f32.mxu0 0.0
    %270 = vmatmul.mubr.f32.gmra.mrb[0].mxu0 %v170
    %v271 = vpop.f32.mrb[0].mxu0
    %v272 = vadd.f32 %v193, %v271
    %v273 = vpop.f32.mrb[0].mxu0
    %274 = vmatprep.mubr.f32.mxu0 0.0
    %275 = vmatmul.mubr.f32.gmra.mrb[0].mxu0 %v171
    %v276 = vpop.f32.mrb[0].mxu0
    %v277 = vadd.f32 %v193, %v276
    %v278 = vpop.f32.mrb[0].mxu0
    %279 = vdwg.mxu0
    %280 = vst [vmem:[#allocation5] sm:$0xff] %v262
    %281 = vst [vmem:[#allocation5 + $0x8] sm:$0xff] %v267
    %282 = vst [vmem:[#allocation5 + $0x10] sm:$0xff] %v272
    %283 = vst [vmem:[#allocation5 + $0x18] sm:$0xff] %v277
    // Predicated region
    $region26: #{embed_fc_forward.1} parent=1 // pred_check
      _
    $region27: #{embed_fc_forward.1} parent=1 // pred_check_branch
      %285 = sbr.rel (0) target = $region29
    $region28: #{embed_fc_forward.1} parent=1 // pred_region
      %s287 = ssub.s32 512, 512
      %288 = vsyncadd [#allocation4], %s287
      %s289 = sshll.u32 [#allocation5], 4
      %s290 = int_to_ptr.vmem [resolvable:$true] %s289
      %295 = dma.vmem_to_hbm [thread:$0]  %s290, 512, %s5, [#allocation4], 128, 128, 8
    $region29: #{embed_fc_forward.1} parent=1 // pred_fallthru
      _
    // Predicated region
    $region30: #{embed_fc_forward.1} parent=1 // pred_check
      _
    $region31: #{embed_fc_forward.1} parent=1 // pred_check_branch
      %297 = sbr.rel (0) target = $region33
    $region32: #{embed_fc_forward.1} parent=1 // pred_region
      %298 = dma.done [#allocation4], 512
    $region33: #{embed_fc_forward.1} parent=1 // pred_fallthru
      _
    %299 = vsyncpa [#allocation3], 1
    %300 = vsyncpa [#allocation4], 1

</llo_original>
